<compile_context>
chip_gen: v6e
topology: v6e:2x2x1
jax: 0.10.0
libtpu: 0.0.40
codegen_flags: <defaults>
</compile_context>

<pallas_src>
import functools

import jax
import jax.numpy as jnp
from jax import lax
from jax.experimental import pallas as pl
from jax.experimental.pallas import tpu as pltpu

EPS = 1e-5
LANES = 128      # lane tile (last dim)
SUBLANES = 8     # f32 sublane tile (second-to-last dim)


def resblock_kernel(x_ref, valid_ref, nf_ref, nl_ref,
                    w1_ref, g1_ref, be1_ref,
                    w2_ref, g2_ref, be2_ref,
                    o_ref, *, inv_m, matmul_dtype):
    """Lane/sublane-dense refs:
         x_ref, o_ref        : (Mp, Cp)  f32 activations, Mp = pad8(N*L)
         valid/nf/nl_ref     : (Mp, 1)   f32 row masks (valid / not-first / not-last)
         w*_ref              : (3, Cp, Cp) matmul_dtype conv taps (k=0: x[l-1])
         g*/be*_ref          : (1, Cp)   f32 BN gamma / beta (gamma zero-padded)
    """
    Mp, Cp = x_ref.shape
    md = matmul_dtype

    x = x_ref[...]                                   # (Mp, Cp) f32
    valid = valid_ref[...]                           # (Mp, 1)  f32
    nf = nf_ref[...].astype(md)                      # (Mp, 1)
    nl = nl_ref[...].astype(md)
    zrow = jnp.zeros((1, Cp), md)

    def conv3(h, w_ref):
        # h: (Mp, Cp) in matmul_dtype, guaranteed zero on padded rows.
        # x[l-1] at row l: shift down one row; x[l+1]: shift up one row.
        # Per-sequence boundaries (and padded rows) are zeroed by the masks.
        hm1 = jnp.concatenate([zrow, h[:-1, :]], axis=0) * nf
        hp1 = jnp.concatenate([h[1:, :], zrow], axis=0) * nl
        # Three accumulating MXU dots (no im2col temporary).
        y = jnp.dot(h, w_ref[1], preferred_element_type=jnp.float32)
        y = y + jnp.dot(hm1, w_ref[0], preferred_element_type=jnp.float32)
        y = y + jnp.dot(hp1, w_ref[2], preferred_element_type=jnp.float32)
        return y                                     # (Mp, Cp) f32
        # NOTE: conv bias intentionally omitted -- exactly cancelled by the
        # training-mode BatchNorm mean subtraction that follows.

    def bn_relu(y, gamma, beta):
        # Padded rows of y are exactly zero, so plain sums with inv_m = 1/M
        # give the statistics over the real (N*L) rows only.
        s = jnp.sum(y, axis=0, keepdims=True)        # (1, Cp)
        ss = jnp.sum(y * y, axis=0, keepdims=True)   # (1, Cp)
        mean = s * inv_m
        var = jnp.maximum(ss * inv_m - mean * mean, 0.0)   # clamp cancellation
        scale = gamma * lax.rsqrt(var + EPS)         # EUP rsqrt; zero on pad lanes
        shift = beta - mean * scale
        return jnp.maximum(y * scale + shift, 0.0)   # 2 VALU ops + max

    h = bn_relu(conv3(x.astype(md), w1_ref), g1_ref[...], be1_ref[...])
    # Re-zero padded rows (BN shift made them nonzero) and cast once for conv2.
    h = (h * valid).astype(md)
    h = bn_relu(conv3(h, w2_ref), g2_ref[...], be2_ref[...])
    o_ref[...] = h + x                               # res = body(x) + x


def _vmem_limit_bytes():
    """Generation-aware scoped-VMEM limit: ~75% of physical, capped at 100 MiB.
    (v5e/v6e: ~96 MiB of 128 MiB; v7x: ~48 MiB of 64 MiB.)"""
    try:
        cap = pltpu.get_tpu_info().vmem_capacity_bytes
    except Exception:                                # no TPU / interpret mode
        return 64 * 1024 * 1024
    return int(min(cap * 3 // 4, 100 * 1024 * 1024))


def init_params(key, C, K=3):
    """Deterministic synthetic parameters.  PyTorch Conv1d weight (Cout,Cin,K)
    is stored pre-transposed as (K, Cin, Cout); BN gamma=1, beta=0 as in
    __init__.  Conv biases are generated (and used by the reference) but
    dropped inside the kernel -- equivalent under training-mode BN."""
    k1, k2, k3, k4 = jax.random.split(key, 4)
    scale = 1.0 / float(C * K) ** 0.5
    w1 = jax.random.uniform(k1, (K, C, C), jnp.float32, -scale, scale)
    b1 = jax.random.uniform(k2, (1, 1, C), jnp.float32, -scale, scale)
    w2 = jax.random.uniform(k3, (K, C, C), jnp.float32, -scale, scale)
    b2 = jax.random.uniform(k4, (1, 1, C), jnp.float32, -scale, scale)
    ones = jnp.ones((1, 1, C), jnp.float32)
    zeros = jnp.zeros((1, 1, C), jnp.float32)
    return dict(w1=w1, b1=b1, g1=ones, be1=zeros,
                w2=w2, b2=b2, g2=ones, be2=zeros)


def resblock_forward(x_ncl, p, *, matmul_dtype=jnp.bfloat16):
    """x_ncl: (N, C, L) like the PyTorch module.  Returns (N, C, L) f32."""
    N, C, L = x_ncl.shape
    M = N * L
    Mp = ((M + SUBLANES - 1) // SUBLANES) * SUBLANES     # sublane-aligned rows
    Cp = ((C + LANES - 1) // LANES) * LANES              # lane-dense channels

    # One-time layout conversion outside the kernel.
    x = jnp.transpose(x_ncl.astype(jnp.float32), (0, 2, 1)).reshape(M, C)
    x = jnp.pad(x, ((0, Mp - M), (0, Cp - C)))           # (Mp, Cp), pads are zero

    def pad_w(w):                                        # (3,C,C) -> (3,Cp,Cp)
        w = jnp.pad(w.astype(jnp.float32),
                    ((0, 0), (0, Cp - C), (0, Cp - C)))
        return w.astype(matmul_dtype)

    def pad_v(v):                                        # (1,1,C) -> (1,Cp)
        v = jnp.reshape(v.astype(jnp.float32), (1, C))
        return jnp.pad(v, ((0, 0), (0, Cp - C)))         # gamma pads with ZEROS

    # Tiny (Mp, 1) row masks: row r is sequence position r % L of batch r // L.
    rows = jnp.arange(Mp, dtype=jnp.int32)
    valid_b = rows < M
    pos = rows % L
    valid = valid_b.astype(jnp.float32)[:, None]
    not_first = (valid_b & (pos != 0)).astype(jnp.float32)[:, None]
    not_last = (valid_b & (pos != (L - 1))).astype(jnp.float32)[:, None]

    args = (x, valid, not_first, not_last,
            pad_w(p["w1"]), pad_v(p["g1"]), pad_v(p["be1"]),
            pad_w(p["w2"]), pad_v(p["g2"]), pad_v(p["be2"]))

    vmem = pl.BlockSpec(memory_space=pltpu.MemorySpace.VMEM)
    kernel = functools.partial(resblock_kernel, inv_m=1.0 / M,
                               matmul_dtype=matmul_dtype)
    out = pl.pallas_call(
        kernel,
        out_shape=jax.ShapeDtypeStruct((Mp, Cp), jnp.float32),
        in_specs=[vmem] * len(args),
        out_specs=vmem,
        compiler_params=pltpu.CompilerParams(
            vmem_limit_bytes=_vmem_limit_bytes()),
    )(*args)

    out = out[:M, :C].reshape(N, L, C)
    return jnp.transpose(out, (0, 2, 1))                 # back to (N, C, L)


# ---------------------------------------------------------------------------
# Pure-JAX reference (correctness checking only; keeps the conv bias).
def _ref_forward(x_ncl, p):
    x = jnp.transpose(x_ncl, (0, 2, 1)).astype(jnp.float32)  # (N, L, C)
    N, L, C = x.shape

    def conv(h, w, b):
        hp = jnp.pad(h, ((0, 0), (1, 1), (0, 0)))
        y = jnp.zeros((N, L, C), jnp.float32)
        for k in range(3):
            y = y + jnp.einsum("nlc,cd->nld", hp[:, k:k + L, :], w[k])
        return y + b

    def bn_relu(y, g, be):
        m = jnp.mean(y, axis=(0, 1), keepdims=True)
        v = jnp.mean((y - m) ** 2, axis=(0, 1), keepdims=True)
        return jnp.maximum((y - m) / jnp.sqrt(v + EPS) * g + be, 0.0)

    h = bn_relu(conv(x, p["w1"], p["b1"]), p["g1"], p["be1"])
    h = bn_relu(conv(h, p["w2"], p["b2"]), p["g2"], p["be2"])
    return jnp.transpose(h + x, (0, 2, 1))


if __name__ == "__main__":
    N, C, L = 2, 64, 16          # num_ft=64 (module default), small batch/seq
    key = jax.random.PRNGKey(0)
    kx, kp = jax.random.split(key)
    x = jax.random.normal(kx, (N, C, L), jnp.float32)
    params = init_params(kp, C)

    ref = _ref_forward(x, params)

    # Default bf16-MXU path (looser tolerance: two conv layers of bf16 rounding).
    out_bf16 = jax.block_until_ready(resblock_forward(x, params))
    assert out_bf16.shape == (N, C, L)
    assert jnp.allclose(out_bf16, ref, rtol=3e-2, atol=3e-2), "bf16 path mismatch"

    # f32 path matches the f32 reference tightly.
    out_f32 = jax.block_until_ready(
        resblock_forward(x, params, matmul_dtype=jnp.float32))
    assert jnp.allclose(out_f32, ref, rtol=1e-4, atol=1e-4), "f32 path mismatch"

    print("KERNEL_OK")
</pallas_src>

<mosaic_0001>
module attributes {stable_mosaic.version = 11 : i64} {
  func.func @resblock_kernel(%arg0: memref<32x128xf32, #tpu.memory_space<vmem>>, %arg1: memref<32x1xf32, #tpu.memory_space<vmem>>, %arg2: memref<32x1xf32, #tpu.memory_space<vmem>>, %arg3: memref<32x1xf32, #tpu.memory_space<vmem>>, %arg4: memref<3x128x128xbf16, #tpu.memory_space<vmem>>, %arg5: memref<1x128xf32, #tpu.memory_space<vmem>>, %arg6: memref<1x128xf32, #tpu.memory_space<vmem>>, %arg7: memref<3x128x128xbf16, #tpu.memory_space<vmem>>, %arg8: memref<1x128xf32, #tpu.memory_space<vmem>>, %arg9: memref<1x128xf32, #tpu.memory_space<vmem>>, %arg10: memref<32x128xf32, #tpu.memory_space<vmem>>) attributes {dimension_semantics = [], scalar_prefetch = 0 : i64, scratch_operands = 0 : i64, tpu.core_type = #tpu.core_type<tc>} {
    %c0 = arith.constant 0 : index
    %c0_0 = arith.constant 0 : index
    %0 = vector.load %arg0[%c0, %c0_0] : memref<32x128xf32, #tpu.memory_space<vmem>>, vector<32x128xf32>
    %c0_1 = arith.constant 0 : index
    %c0_2 = arith.constant 0 : index
    %1 = vector.load %arg1[%c0_1, %c0_2] : memref<32x1xf32, #tpu.memory_space<vmem>>, vector<32x1xf32>
    %c0_3 = arith.constant 0 : index
    %c0_4 = arith.constant 0 : index
    %2 = vector.load %arg2[%c0_3, %c0_4] : memref<32x1xf32, #tpu.memory_space<vmem>>, vector<32x1xf32>
    %3 = arith.truncf %2 : vector<32x1xf32> to vector<32x1xbf16>
    %c0_5 = arith.constant 0 : index
    %c0_6 = arith.constant 0 : index
    %4 = vector.load %arg3[%c0_5, %c0_6] : memref<32x1xf32, #tpu.memory_space<vmem>>, vector<32x1xf32>
    %5 = arith.truncf %4 : vector<32x1xf32> to vector<32x1xbf16>
    %cst = arith.constant 0.000000e+00 : bf16
    %6 = vector.broadcast %cst : bf16 to vector<1x128xbf16>
    %7 = arith.truncf %0 : vector<32x128xf32> to vector<32x128xbf16>
    %8 = vector.extract_strided_slice %7 {offsets = [0, 0], sizes = [31, 128], strides = [1, 1]} : vector<32x128xbf16> to vector<31x128xbf16>
    %9 = tpu.concatenate %6, %8 in 0 : vector<1x128xbf16>, vector<31x128xbf16> -> vector<32x128xbf16>
    %10 = vector.broadcast %3 : vector<32x1xbf16> to vector<32x128xbf16>
    %11 = arith.mulf %9, %10 : vector<32x128xbf16>
    %12 = vector.extract_strided_slice %7 {offsets = [1, 0], sizes = [31, 128], strides = [1, 1]} : vector<32x128xbf16> to vector<31x128xbf16>
    %13 = tpu.concatenate %12, %6 in 0 : vector<31x128xbf16>, vector<1x128xbf16> -> vector<32x128xbf16>
    %14 = vector.broadcast %5 : vector<32x1xbf16> to vector<32x128xbf16>
    %15 = arith.mulf %13, %14 : vector<32x128xbf16>
    %c1 = arith.constant 1 : index
    %c0_7 = arith.constant 0 : index
    %c0_8 = arith.constant 0 : index
    %16 = vector.load %arg4[%c1, %c0_7, %c0_8] : memref<3x128x128xbf16, #tpu.memory_space<vmem>>, vector<1x128x128xbf16>
    %17 = vector.shape_cast %16 : vector<1x128x128xbf16> to vector<128x128xbf16>
    %cst_9 = arith.constant dense<0.000000e+00> : vector<32x128xf32>
    %18 = tpu.matmul %7, %17, %cst_9 {dimension_numbers = #tpu.dot_dimension_numbers<[1], [0], [0], [1], [0, 0, 1, 1], [], []>} : vector<32x128xbf16>, vector<128x128xbf16>, vector<32x128xf32> -> vector<32x128xf32>
    %c0_10 = arith.constant 0 : index
    %c0_11 = arith.constant 0 : index
    %c0_12 = arith.constant 0 : index
    %19 = vector.load %arg4[%c0_10, %c0_11, %c0_12] : memref<3x128x128xbf16, #tpu.memory_space<vmem>>, vector<1x128x128xbf16>
    %20 = vector.shape_cast %19 : vector<1x128x128xbf16> to vector<128x128xbf16>
    %cst_13 = arith.constant dense<0.000000e+00> : vector<32x128xf32>
    %21 = tpu.matmul %11, %20, %cst_13 {dimension_numbers = #tpu.dot_dimension_numbers<[1], [0], [0], [1], [0, 0, 1, 1], [], []>} : vector<32x128xbf16>, vector<128x128xbf16>, vector<32x128xf32> -> vector<32x128xf32>
    %22 = arith.addf %18, %21 : vector<32x128xf32>
    %c2 = arith.constant 2 : index
    %c0_14 = arith.constant 0 : index
    %c0_15 = arith.constant 0 : index
    %23 = vector.load %arg4[%c2, %c0_14, %c0_15] : memref<3x128x128xbf16, #tpu.memory_space<vmem>>, vector<1x128x128xbf16>
    %24 = vector.shape_cast %23 : vector<1x128x128xbf16> to vector<128x128xbf16>
    %cst_16 = arith.constant dense<0.000000e+00> : vector<32x128xf32>
    %25 = tpu.matmul %15, %24, %cst_16 {dimension_numbers = #tpu.dot_dimension_numbers<[1], [0], [0], [1], [0, 0, 1, 1], [], []>} : vector<32x128xbf16>, vector<128x128xbf16>, vector<32x128xf32> -> vector<32x128xf32>
    %26 = arith.addf %22, %25 : vector<32x128xf32>
    %c0_17 = arith.constant 0 : index
    %c0_18 = arith.constant 0 : index
    %27 = vector.load %arg5[%c0_17, %c0_18] : memref<1x128xf32, #tpu.memory_space<vmem>>, vector<1x128xf32>
    %c0_19 = arith.constant 0 : index
    %c0_20 = arith.constant 0 : index
    %28 = vector.load %arg6[%c0_19, %c0_20] : memref<1x128xf32, #tpu.memory_space<vmem>>, vector<1x128xf32>
    %cst_21 = arith.constant dense<0.000000e+00> : vector<128xf32>
    %29 = vector.multi_reduction <add>, %26, %cst_21 [0] : vector<32x128xf32> to vector<128xf32>
    %30 = vector.shape_cast %29 : vector<128xf32> to vector<1x128xf32>
    %31 = arith.mulf %26, %26 : vector<32x128xf32>
    %cst_22 = arith.constant dense<0.000000e+00> : vector<128xf32>
    %32 = vector.multi_reduction <add>, %31, %cst_22 [0] : vector<32x128xf32> to vector<128xf32>
    %33 = vector.shape_cast %32 : vector<128xf32> to vector<1x128xf32>
    %cst_23 = arith.constant 3.125000e-02 : f32
    %34 = vector.broadcast %cst_23 : f32 to vector<1x128xf32>
    %35 = arith.mulf %30, %34 : vector<1x128xf32>
    %cst_24 = arith.constant 3.125000e-02 : f32
    %36 = vector.broadcast %cst_24 : f32 to vector<1x128xf32>
    %37 = arith.mulf %33, %36 : vector<1x128xf32>
    %38 = arith.mulf %35, %35 : vector<1x128xf32>
    %39 = arith.subf %37, %38 : vector<1x128xf32>
    %cst_25 = arith.constant 0.000000e+00 : f32
    %40 = vector.broadcast %cst_25 : f32 to vector<1x128xf32>
    %41 = arith.maximumf %39, %40 : vector<1x128xf32>
    %cst_26 = arith.constant 9.99999974E-6 : f32
    %42 = vector.broadcast %cst_26 : f32 to vector<1x128xf32>
    %43 = arith.addf %41, %42 : vector<1x128xf32>
    %44 = math.rsqrt %43 : vector<1x128xf32>
    %45 = arith.mulf %27, %44 : vector<1x128xf32>
    %46 = arith.mulf %35, %45 : vector<1x128xf32>
    %47 = arith.subf %28, %46 : vector<1x128xf32>
    %48 = vector.broadcast %45 : vector<1x128xf32> to vector<32x128xf32>
    %49 = arith.mulf %26, %48 : vector<32x128xf32>
    %50 = vector.broadcast %47 : vector<1x128xf32> to vector<32x128xf32>
    %51 = arith.addf %49, %50 : vector<32x128xf32>
    %cst_27 = arith.constant 0.000000e+00 : f32
    %52 = vector.broadcast %cst_27 : f32 to vector<32x128xf32>
    %53 = arith.maximumf %51, %52 : vector<32x128xf32>
    %54 = vector.broadcast %1 : vector<32x1xf32> to vector<32x128xf32>
    %55 = arith.mulf %53, %54 : vector<32x128xf32>
    %56 = arith.truncf %55 : vector<32x128xf32> to vector<32x128xbf16>
    %57 = vector.extract_strided_slice %56 {offsets = [0, 0], sizes = [31, 128], strides = [1, 1]} : vector<32x128xbf16> to vector<31x128xbf16>
    %58 = tpu.concatenate %6, %57 in 0 : vector<1x128xbf16>, vector<31x128xbf16> -> vector<32x128xbf16>
    %59 = vector.broadcast %3 : vector<32x1xbf16> to vector<32x128xbf16>
    %60 = arith.mulf %58, %59 : vector<32x128xbf16>
    %61 = vector.extract_strided_slice %56 {offsets = [1, 0], sizes = [31, 128], strides = [1, 1]} : vector<32x128xbf16> to vector<31x128xbf16>
    %62 = tpu.concatenate %61, %6 in 0 : vector<31x128xbf16>, vector<1x128xbf16> -> vector<32x128xbf16>
    %63 = vector.broadcast %5 : vector<32x1xbf16> to vector<32x128xbf16>
    %64 = arith.mulf %62, %63 : vector<32x128xbf16>
    %c1_28 = arith.constant 1 : index
    %c0_29 = arith.constant 0 : index
    %c0_30 = arith.constant 0 : index
    %65 = vector.load %arg7[%c1_28, %c0_29, %c0_30] : memref<3x128x128xbf16, #tpu.memory_space<vmem>>, vector<1x128x128xbf16>
    %66 = vector.shape_cast %65 : vector<1x128x128xbf16> to vector<128x128xbf16>
    %cst_31 = arith.constant dense<0.000000e+00> : vector<32x128xf32>
    %67 = tpu.matmul %56, %66, %cst_31 {dimension_numbers = #tpu.dot_dimension_numbers<[1], [0], [0], [1], [0, 0, 1, 1], [], []>} : vector<32x128xbf16>, vector<128x128xbf16>, vector<32x128xf32> -> vector<32x128xf32>
    %c0_32 = arith.constant 0 : index
    %c0_33 = arith.constant 0 : index
    %c0_34 = arith.constant 0 : index
    %68 = vector.load %arg7[%c0_32, %c0_33, %c0_34] : memref<3x128x128xbf16, #tpu.memory_space<vmem>>, vector<1x128x128xbf16>
    %69 = vector.shape_cast %68 : vector<1x128x128xbf16> to vector<128x128xbf16>
    %cst_35 = arith.constant dense<0.000000e+00> : vector<32x128xf32>
    %70 = tpu.matmul %60, %69, %cst_35 {dimension_numbers = #tpu.dot_dimension_numbers<[1], [0], [0], [1], [0, 0, 1, 1], [], []>} : vector<32x128xbf16>, vector<128x128xbf16>, vector<32x128xf32> -> vector<32x128xf32>
    %71 = arith.addf %67, %70 : vector<32x128xf32>
    %c2_36 = arith.constant 2 : index
    %c0_37 = arith.constant 0 : index
    %c0_38 = arith.constant 0 : index
    %72 = vector.load %arg7[%c2_36, %c0_37, %c0_38] : memref<3x128x128xbf16, #tpu.memory_space<vmem>>, vector<1x128x128xbf16>
    %73 = vector.shape_cast %72 : vector<1x128x128xbf16> to vector<128x128xbf16>
    %cst_39 = arith.constant dense<0.000000e+00> : vector<32x128xf32>
    %74 = tpu.matmul %64, %73, %cst_39 {dimension_numbers = #tpu.dot_dimension_numbers<[1], [0], [0], [1], [0, 0, 1, 1], [], []>} : vector<32x128xbf16>, vector<128x128xbf16>, vector<32x128xf32> -> vector<32x128xf32>
    %75 = arith.addf %71, %74 : vector<32x128xf32>
    %c0_40 = arith.constant 0 : index
    %c0_41 = arith.constant 0 : index
    %76 = vector.load %arg8[%c0_40, %c0_41] : memref<1x128xf32, #tpu.memory_space<vmem>>, vector<1x128xf32>
    %c0_42 = arith.constant 0 : index
    %c0_43 = arith.constant 0 : index
    %77 = vector.load %arg9[%c0_42, %c0_43] : memref<1x128xf32, #tpu.memory_space<vmem>>, vector<1x128xf32>
    %cst_44 = arith.constant dense<0.000000e+00> : vector<128xf32>
    %78 = vector.multi_reduction <add>, %75, %cst_44 [0] : vector<32x128xf32> to vector<128xf32>
    %79 = vector.shape_cast %78 : vector<128xf32> to vector<1x128xf32>
    %80 = arith.mulf %75, %75 : vector<32x128xf32>
    %cst_45 = arith.constant dense<0.000000e+00> : vector<128xf32>
    %81 = vector.multi_reduction <add>, %80, %cst_45 [0] : vector<32x128xf32> to vector<128xf32>
    %82 = vector.shape_cast %81 : vector<128xf32> to vector<1x128xf32>
    %cst_46 = arith.constant 3.125000e-02 : f32
    %83 = vector.broadcast %cst_46 : f32 to vector<1x128xf32>
    %84 = arith.mulf %79, %83 : vector<1x128xf32>
    %cst_47 = arith.constant 3.125000e-02 : f32
    %85 = vector.broadcast %cst_47 : f32 to vector<1x128xf32>
    %86 = arith.mulf %82, %85 : vector<1x128xf32>
    %87 = arith.mulf %84, %84 : vector<1x128xf32>
    %88 = arith.subf %86, %87 : vector<1x128xf32>
    %cst_48 = arith.constant 0.000000e+00 : f32
    %89 = vector.broadcast %cst_48 : f32 to vector<1x128xf32>
    %90 = arith.maximumf %88, %89 : vector<1x128xf32>
    %cst_49 = arith.constant 9.99999974E-6 : f32
    %91 = vector.broadcast %cst_49 : f32 to vector<1x128xf32>
    %92 = arith.addf %90, %91 : vector<1x128xf32>
    %93 = math.rsqrt %92 : vector<1x128xf32>
    %94 = arith.mulf %76, %93 : vector<1x128xf32>
    %95 = arith.mulf %84, %94 : vector<1x128xf32>
    %96 = arith.subf %77, %95 : vector<1x128xf32>
    %97 = vector.broadcast %94 : vector<1x128xf32> to vector<32x128xf32>
    %98 = arith.mulf %75, %97 : vector<32x128xf32>
    %99 = vector.broadcast %96 : vector<1x128xf32> to vector<32x128xf32>
    %100 = arith.addf %98, %99 : vector<32x128xf32>
    %cst_50 = arith.constant 0.000000e+00 : f32
    %101 = vector.broadcast %cst_50 : f32 to vector<32x128xf32>
    %102 = arith.maximumf %100, %101 : vector<32x128xf32>
    %103 = arith.addf %102, %0 : vector<32x128xf32>
    %c0_51 = arith.constant 0 : index
    %c0_52 = arith.constant 0 : index
    %104 = vector.load %arg10[%c0_51, %c0_52] : memref<32x128xf32, #tpu.memory_space<vmem>>, vector<32x128xf32>
    tpu.vector_store %arg10[%c0_51, %c0_52], %103 {strides = array<i32>} : memref<32x128xf32, #tpu.memory_space<vmem>>, vector<32x128xf32>,
    return
  }
}

</mosaic_0001>

<llo_original>
// kernel: tpu_custom_call.1
$region0: #{tpu_custom_call.1}
  #allocation0 [shape = 'u32[]', space=smem, size = 0x4, offset = 0x4, fixed_abs, tag = 'smem constant byte address 0x4 - core index']
  #allocation1 [shape = 'u32[144,128]{1,0:T(1,128)}', space=vmem, size = 0x12000, scoped, tag = 'internal scratch']
  %s0 = inlined_call_operand.vmem [shape: f32[32,128], index: 0, kind: input, shape index: {}]
  %s1 = inlined_call_operand.vmem [shape: f32[32,1], index: 1, kind: input, shape index: {}]
  %s2 = inlined_call_operand.vmem [shape: f32[32,1], index: 2, kind: input, shape index: {}]
  %s3 = inlined_call_operand.vmem [shape: f32[32,1], index: 3, kind: input, shape index: {}]
  %s4 = inlined_call_operand.hbm [shape: bf16[3,128,128], index: 4, kind: input, shape index: {}]
  %s5 = inlined_call_operand.vmem [shape: f32[1,128], index: 5, kind: input, shape index: {}]
  %s6 = inlined_call_operand.vmem [shape: f32[1,128], index: 6, kind: input, shape index: {}]
  %s7 = inlined_call_operand.hbm [shape: bf16[3,128,128], index: 7, kind: input, shape index: {}]
  %s8 = inlined_call_operand.vmem [shape: f32[1,128], index: 8, kind: input, shape index: {}]
  %s9 = inlined_call_operand.vmem [shape: f32[1,128], index: 9, kind: input, shape index: {}]
  %s10 = inlined_call_operand.hbm [shape: f32[32,128], index: 10, kind: output, shape index: {}]
  %s11 = sld [smem:[#allocation0]]
  $region58: #{tpu_custom_call.1} parent=0
    _
  %s13 = ssub.s32 1, %s11
  %s14 = scalar_select 0, %s13, %s11
  $region1: #{tpu_custom_call.1} parent=0
    #allocation2 [shape = 'u8[98304]{0}', space=vmem, size = 0x18000, scoped, tag = 'input window, operand 4, single buffered']
    #allocation3 [shape = 's32[1]{0}', space=sflag, size = 0x4, scoped, tag = 'scoped memory for tpu_custom_call.1']
    #allocation4 [shape = 's32[1]{0}', space=sflag, size = 0x4, scoped, tag = 'scoped memory for tpu_custom_call.1']
    #allocation5 [shape = 'u8[98304]{0}', space=vmem, size = 0x18000, scoped, tag = 'input window, operand 7, single buffered']
    #allocation6 [shape = 's32[1]{0}', space=sflag, size = 0x4, scoped, tag = 'scoped memory for tpu_custom_call.1']
    #allocation7 [shape = 'u8[16384]{0}', space=vmem, size = 0x4000, scoped, tag = 'output window, operand 0, single buffered']
    %15 = vsyncpa [#allocation3], 0
    %16 = vsyncpa [#allocation6], 0
    %17 = vsyncpa [#allocation4], 0
    // Predicated region
    $region2: #{tpu_custom_call.1} parent=1 // pred_check
      _
    $region3: #{tpu_custom_call.1} parent=1 // pred_check_branch
      %19 = sbr.rel (0) target = $region5
    $region4: #{tpu_custom_call.1} parent=1 // pred_region
      _
    $region5: #{tpu_custom_call.1} parent=1 // pred_fallthru
      _
    // Predicated region
    $region6: #{tpu_custom_call.1} parent=1 // pred_check
      _
    $region7: #{tpu_custom_call.1} parent=1 // pred_check_branch
      %21 = sbr.rel (0) target = $region9
    $region8: #{tpu_custom_call.1} parent=1 // pred_region
      _
    $region9: #{tpu_custom_call.1} parent=1 // pred_fallthru
      _
    // Predicated region
    $region10: #{tpu_custom_call.1} parent=1 // pred_check
      _
    $region11: #{tpu_custom_call.1} parent=1 // pred_check_branch
      %23 = sbr.rel (0) target = $region13
    $region12: #{tpu_custom_call.1} parent=1 // pred_region
      _
    $region13: #{tpu_custom_call.1} parent=1 // pred_fallthru
      _
    // Predicated region
    $region14: #{tpu_custom_call.1} parent=1 // pred_check
      _
    $region15: #{tpu_custom_call.1} parent=1 // pred_check_branch
      %25 = sbr.rel (0) target = $region17
    $region16: #{tpu_custom_call.1} parent=1 // pred_region
      _
    $region17: #{tpu_custom_call.1} parent=1 // pred_fallthru
      _
    // Predicated region
    $region18: #{tpu_custom_call.1} parent=1 // pred_check
      _
    $region19: #{tpu_custom_call.1} parent=1 // pred_check_branch
      %27 = sbr.rel (0) target = $region21
    $region20: #{tpu_custom_call.1} parent=1 // pred_region
      %s29 = ssub.s32 3072, 3072
      %30 = vsyncadd [#allocation3], %s29
      %s31 = sshll.u32 [#allocation2], 4
      %s32 = int_to_ptr.vmem [resolvable:$true] %s31
      %37 = dma.hbm_to_vmem [thread:$0]  %s4, 3072, %s32, [#allocation3], 64, 64, 4
    $region21: #{tpu_custom_call.1} parent=1 // pred_fallthru
      _
    // Predicated region
    $region22: #{tpu_custom_call.1} parent=1 // pred_check
      _
    $region23: #{tpu_custom_call.1} parent=1 // pred_check_branch
      %39 = sbr.rel (0) target = $region25
    $region24: #{tpu_custom_call.1} parent=1 // pred_region
      _
    $region25: #{tpu_custom_call.1} parent=1 // pred_fallthru
      _
    // Predicated region
    $region26: #{tpu_custom_call.1} parent=1 // pred_check
      _
    $region27: #{tpu_custom_call.1} parent=1 // pred_check_branch
      %41 = sbr.rel (0) target = $region29
    $region28: #{tpu_custom_call.1} parent=1 // pred_region
      _
    $region29: #{tpu_custom_call.1} parent=1 // pred_fallthru
      _
    // Predicated region
    $region30: #{tpu_custom_call.1} parent=1 // pred_check
      _
    $region31: #{tpu_custom_call.1} parent=1 // pred_check_branch
      %43 = sbr.rel (0) target = $region33
    $region32: #{tpu_custom_call.1} parent=1 // pred_region
      %s45 = ssub.s32 3072, 3072
      %46 = vsyncadd [#allocation6], %s45
      %s47 = sshll.u32 [#allocation5], 4
      %s48 = int_to_ptr.vmem [resolvable:$true] %s47
      %53 = dma.hbm_to_vmem [thread:$0]  %s7, 3072, %s48, [#allocation6], 64, 64, 4
    $region33: #{tpu_custom_call.1} parent=1 // pred_fallthru
      _
    // Predicated region
    $region34: #{tpu_custom_call.1} parent=1 // pred_check
      _
    $region35: #{tpu_custom_call.1} parent=1 // pred_check_branch
      %55 = sbr.rel (0) target = $region37
    $region36: #{tpu_custom_call.1} parent=1 // pred_region
      _
    $region37: #{tpu_custom_call.1} parent=1 // pred_fallthru
      _
    // Predicated region
    $region38: #{tpu_custom_call.1} parent=1 // pred_check
      _
    $region39: #{tpu_custom_call.1} parent=1 // pred_check_branch
      %57 = sbr.rel (0) target = $region41
    $region40: #{tpu_custom_call.1} parent=1 // pred_region
      _
    $region41: #{tpu_custom_call.1} parent=1 // pred_fallthru
      _
    // Predicated region
    $region42: #{tpu_custom_call.1} parent=1 // pred_check
      _
    $region43: #{tpu_custom_call.1} parent=1 // pred_check_branch
      %59 = sbr.rel (0) target = $region45
    $region44: #{tpu_custom_call.1} parent=1 // pred_region
      %60 = dma.done [#allocation3], 3072
    $region45: #{tpu_custom_call.1} parent=1 // pred_fallthru
      _
    // Predicated region
    $region46: #{tpu_custom_call.1} parent=1 // pred_check
      _
    $region47: #{tpu_custom_call.1} parent=1 // pred_check_branch
      %62 = sbr.rel (0) target = $region49
    $region48: #{tpu_custom_call.1} parent=1 // pred_region
      %63 = dma.done [#allocation6], 3072
    $region49: #{tpu_custom_call.1} parent=1 // pred_fallthru
      _
    %v65 = vld [vmem:[%s0] sm:$0xff]
    %v66 = vld [vmem:[%s0 + $0x8] sm:$0xff]
    %v67 = vld [vmem:[%s0 + $0x10] sm:$0xff]
    %v68 = vld [vmem:[%s0 + $0x18] sm:$0xff]
    %v69 = vld [vmem:[%s1] sm:$0xff]
    %v70 = vld [vmem:[%s1 + $0x8] sm:$0xff]
    %v71 = vld [vmem:[%s1 + $0x10] sm:$0xff]
    %v72 = vld [vmem:[%s1 + $0x18] sm:$0xff]
    %v73 = vld [vmem:[%s2] sm:$0xff]
    %v74 = vld [vmem:[%s2 + $0x8] sm:$0xff]
    %v75 = vld [vmem:[%s2 + $0x10] sm:$0xff]
    %v76 = vld [vmem:[%s2 + $0x18] sm:$0xff]
    %v77 = vpack.c.bf16 %v74, %v73
    %v78 = vpack.c.bf16 %v76, %v75
    %v79 = vld [vmem:[%s3] sm:$0xff]
    %v80 = vld [vmem:[%s3 + $0x8] sm:$0xff]
    %v81 = vld [vmem:[%s3 + $0x10] sm:$0xff]
    %v82 = vld [vmem:[%s3 + $0x18] sm:$0xff]
    %v83 = vpack.c.bf16 %v80, %v79
    %v84 = vpack.c.bf16 %v82, %v81
    %v85 = vpack.c.bf16 %v66, %v65
    %v86 = vpack.c.bf16 %v68, %v67
    %vm87 = vsmask.f32 256
    %v89 = vshrl.u32 %v85, 16
    %v91 = vrot.slane %v89, 7
    %v92 = vshll.u32 %v85, 16
    %v94 = vor.u32 %v91, %v92
    %v96 = vshrl.u32 %v86, 16
    %v98 = vrot.slane %v96, 7
    %v99 = vshll.u32 %v86, 16
    %v101 = vor.u32 %v98, %v99
    %v102 = vsel %vm87, %v91, %v101
    %vm105 = vcmask 1040384
    %vm106 = vmand %vm105, %vm87
    %v107 = vsel %vm106, 0, %v94
    %109 = vset.pattern.permute.xlu0 0
    %110 = vperm.xlu0 %109, %v77
    %v111 = vpop.permute.xlu0 %110
    %114 = vset.pattern.permute.xlu0 0
    %115 = vperm.xlu0 %114, %v78
    %v116 = vpop.permute.xlu0 %115
    %v118 = vmul.bf16 %v107, %v111
    %v119 = vmul.bf16 %v102, %v116
    %vm120 = vsmask.f32 7424
    %v121 = vrot.slane %v92, 1
    %v122 = vor.u32 %v89, %v121
    %v123 = vrot.slane %v99, 1
    %v124 = vsel %vm120, %v122, %v123
    %v125 = vor.u32 %v96, %v123
    %vm128 = vcmask 1047552
    %vm129 = vmand %vm128, %vm120
    %v130 = vsel %vm129, %v125, 0
    %132 = vset.pattern.permute.xlu0 0
    %133 = vperm.xlu0 %132, %v83
    %v134 = vpop.permute.xlu0 %133
    %137 = vset.pattern.permute.xlu0 0
    %138 = vperm.xlu0 %137, %v84
    %v139 = vpop.permute.xlu0 %138
    %v141 = vmul.bf16 %v124, %v134
    %v142 = vmul.bf16 %v130, %v139
    %s143 = scalar_lea.vmem [#allocation2], 64
    %v144 = vld [vmem:[%s143] sm:$0xf]
    %v145 = vld [vmem:[%s143 + $0x4] sm:$0xf]
    %v146 = vld [vmem:[%s143 + $0x8] sm:$0xf]
    %v147 = vld [vmem:[%s143 + $0xc] sm:$0xf]
    %v148 = vld [vmem:[%s143 + $0x10] sm:$0xf]
    %v149 = vld [vmem:[%s143 + $0x14] sm:$0xf]
    %v150 = vld [vmem:[%s143 + $0x18] sm:$0xf]
    %v151 = vld [vmem:[%s143 + $0x1c] sm:$0xf]
    %v152 = vld [vmem:[%s143 + $0x20] sm:$0xf]
    %v153 = vld [vmem:[%s143 + $0x24] sm:$0xf]
    %v154 = vld [vmem:[%s143 + $0x28] sm:$0xf]
    %v155 = vld [vmem:[%s143 + $0x2c] sm:$0xf]
    %v156 = vld [vmem:[%s143 + $0x30] sm:$0xf]
    %v157 = vld [vmem:[%s143 + $0x34] sm:$0xf]
    %v158 = vld [vmem:[%s143 + $0x38] sm:$0xf]
    %v159 = vld [vmem:[%s143 + $0x3c] sm:$0xf]
    %v160 = vld [vmem:[#allocation2] sm:$0xf]
    %v161 = vld [vmem:[#allocation2 + $0x4] sm:$0xf]
    %v162 = vld [vmem:[#allocation2 + $0x8] sm:$0xf]
    %v163 = vld [vmem:[#allocation2 + $0xc] sm:$0xf]
    %v164 = vld [vmem:[#allocation2 + $0x10] sm:$0xf]
    %v165 = vld [vmem:[#allocation2 + $0x14] sm:$0xf]
    %v166 = vld [vmem:[#allocation2 + $0x18] sm:$0xf]
    %v167 = vld [vmem:[#allocation2 + $0x1c] sm:$0xf]
    %v168 = vld [vmem:[#allocation2 + $0x20] sm:$0xf]
    %v169 = vld [vmem:[#allocation2 + $0x24] sm:$0xf]
    %v170 = vld [vmem:[#allocation2 + $0x28] sm:$0xf]
    %v171 = vld [vmem:[#allocation2 + $0x2c] sm:$0xf]
    %v172 = vld [vmem:[#allocation2 + $0x30] sm:$0xf]
    %v173 = vld [vmem:[#allocation2 + $0x34] sm:$0xf]
    %v174 = vld [vmem:[#allocation2 + $0x38] sm:$0xf]
    %v175 = vld [vmem:[#allocation2 + $0x3c] sm:$0xf]
    %v192 = vunpack.c.l.b16 %v160
    %v193 = vunpack.c.l.b16 %v161
    %v194 = vunpack.c.l.b16 %v162
    %v195 = vunpack.c.l.b16 %v163
    %v196 = vunpack.c.l.b16 %v164
    %v197 = vunpack.c.l.b16 %v165
    %v198 = vunpack.c.l.b16 %v166
    %v199 = vunpack.c.l.b16 %v167
    %v200 = vunpack.c.l.b16 %v168
    %v201 = vunpack.c.l.b16 %v169
    %v202 = vunpack.c.l.b16 %v170
    %v203 = vunpack.c.l.b16 %v171
    %v204 = vunpack.c.l.b16 %v172
    %v205 = vunpack.c.l.b16 %v173
    %v206 = vunpack.c.l.b16 %v174
    %v207 = vunpack.c.l.b16 %v175
    %v208 = vpack.c.b16 %v193, %v192
    %v209 = vpack.c.b16 %v195, %v194
    %v210 = vpack.c.b16 %v197, %v196
    %v211 = vpack.c.b16 %v199, %v198
    %v212 = vpack.c.b16 %v201, %v200
    %v213 = vpack.c.b16 %v203, %v202
    %v214 = vpack.c.b16 %v205, %v204
    %v215 = vpack.c.b16 %v207, %v206
    %224 = vmatprep.subr.bf16.mxu0 0
    %225 = vmatpush1.bf16.msra.mxu0 %v215
    %226 = vmatprep.subr.bf16.mxu0 0
    %227 = vmatpush1.bf16.msra.mxu0 %v214
    %228 = vmatprep.subr.bf16.mxu0 0
    %229 = vmatpush1.bf16.msra.mxu0 %v213
    %230 = vmatprep.subr.bf16.mxu0 0
    %231 = vmatpush1.bf16.msra.mxu0 %v212
    %232 = vmatprep.subr.bf16.mxu0 0
    %233 = vmatpush1.bf16.msra.mxu0 %v211
    %234 = vmatprep.subr.bf16.mxu0 0
    %235 = vmatpush1.bf16.msra.mxu0 %v210
    %236 = vmatprep.subr.bf16.mxu0 0
    %237 = vmatpush1.bf16.msra.mxu0 %v209
    %238 = vmatprep.subr.bf16.mxu0 0
    %239 = vmatpush1.bf16.msra.mxu0 %v208
    %240 = vmatprep.subr.bf16.mxu0 0
    %241 = vmatpush2.bf16.msra.mxu0 0
    %242 = vmatprep.subr.bf16.mxu0 0
    %243 = vmatpush2.bf16.msra.mxu0 0
    %244 = vmatprep.subr.bf16.mxu0 0
    %245 = vmatpush2.bf16.msra.mxu0 0
    %246 = vmatprep.subr.bf16.mxu0 0
    %247 = vmatpush2.bf16.msra.mxu0 0
    %248 = vmatprep.subr.bf16.mxu0 0
    %249 = vmatpush2.bf16.msra.mxu0 0
    %250 = vmatprep.subr.bf16.mxu0 0
    %251 = vmatpush2.bf16.msra.mxu0 0
    %252 = vmatprep.subr.bf16.mxu0 0
    %253 = vmatpush2.bf16.msra.mxu0 0
    %254 = vmatprep.subr.bf16.mxu0 0
    %255 = vmatpush2.bf16.msra.mxu0 0
    %256 = vmatprep.mubr.bf16.mxu0 0
    %257 = vmatmul.mubr.bf16.gmra.mxu0 %v118
    %v258 = vpop.f32.mrf.mxu0
    %v259 = vadd.f32 0.0, %v258
    %v260 = vpop.f32.mrf.mxu0
    %v261 = vpop.f32.mrf.mxu0
    %v262 = vadd.f32 0.0, %v261
    %v263 = vpop.f32.mrf.mxu0
    %264 = vmatprep.mubr.bf16.mxu0 0
    %265 = vmatmul.mubr.bf16.gmra.mxu0 %v119
    %v266 = vpop.f32.mrf.mxu0
    %v267 = vadd.f32 0.0, %v266
    %v268 = vpop.f32.mrf.mxu0
    %v269 = vpop.f32.mrf.mxu0
    %v270 = vadd.f32 0.0, %v269
    %v271 = vpop.f32.mrf.mxu0
    %272 = vdwg.mxu0
    %v289 = vunpack.c.l.b16 %v144
    %v290 = vunpack.c.l.b16 %v145
    %v291 = vunpack.c.l.b16 %v146
    %v292 = vunpack.c.l.b16 %v147
    %v293 = vunpack.c.l.b16 %v148
    %v294 = vunpack.c.l.b16 %v149
    %v295 = vunpack.c.l.b16 %v150
    %v296 = vunpack.c.l.b16 %v151
    %v297 = vunpack.c.l.b16 %v152
    %v298 = vunpack.c.l.b16 %v153
    %v299 = vunpack.c.l.b16 %v154
    %v300 = vunpack.c.l.b16 %v155
    %v301 = vunpack.c.l.b16 %v156
    %v302 = vunpack.c.l.b16 %v157
    %v303 = vunpack.c.l.b16 %v158
    %v304 = vunpack.c.l.b16 %v159
    %v305 = vpack.c.b16 %v290, %v289
    %v306 = vpack.c.b16 %v292, %v291
    %v307 = vpack.c.b16 %v294, %v293
    %v308 = vpack.c.b16 %v296, %v295
    %v309 = vpack.c.b16 %v298, %v297
    %v310 = vpack.c.b16 %v300, %v299
    %v311 = vpack.c.b16 %v302, %v301
    %v312 = vpack.c.b16 %v304, %v303
    %321 = vmatprep.subr.bf16.mxu0 0
    %322 = vmatpush1.bf16.msra.mxu0 %v312
    %323 = vmatprep.subr.bf16.mxu0 0
    %324 = vmatpush1.bf16.msra.mxu0 %v311
    %325 = vmatprep.subr.bf16.mxu0 0
    %326 = vmatpush1.bf16.msra.mxu0 %v310
    %327 = vmatprep.subr.bf16.mxu0 0
    %328 = vmatpush1.bf16.msra.mxu0 %v309
    %329 = vmatprep.subr.bf16.mxu0 0
    %330 = vmatpush1.bf16.msra.mxu0 %v308
    %331 = vmatprep.subr.bf16.mxu0 0
    %332 = vmatpush1.bf16.msra.mxu0 %v307
    %333 = vmatprep.subr.bf16.mxu0 0
    %334 = vmatpush1.bf16.msra.mxu0 %v306
    %335 = vmatprep.subr.bf16.mxu0 0
    %336 = vmatpush1.bf16.msra.mxu0 %v305
    %337 = vmatprep.subr.bf16.mxu0 0
    %338 = vmatpush2.bf16.msra.mxu0 0
    %339 = vmatprep.subr.bf16.mxu0 0
    %340 = vmatpush2.bf16.msra.mxu0 0
    %341 = vmatprep.subr.bf16.mxu0 0
    %342 = vmatpush2.bf16.msra.mxu0 0
    %343 = vmatprep.subr.bf16.mxu0 0
    %344 = vmatpush2.bf16.msra.mxu0 0
    %345 = vmatprep.subr.bf16.mxu0 0
    %346 = vmatpush2.bf16.msra.mxu0 0
    %347 = vmatprep.subr.bf16.mxu0 0
    %348 = vmatpush2.bf16.msra.mxu0 0
    %349 = vmatprep.subr.bf16.mxu0 0
    %350 = vmatpush2.bf16.msra.mxu0 0
    %351 = vmatprep.subr.bf16.mxu0 0
    %352 = vmatpush2.bf16.msra.mxu0 0
    %353 = vmatprep.mubr.bf16.mxu0 0
    %354 = vmatmul.mubr.bf16.gmra.mxu0 %v85
    %v355 = vpop.f32.mrf.mxu0
    %v356 = vadd.f32 %v259, %v355
    %v357 = vpop.f32.mrf.mxu0
    %v358 = vpop.f32.mrf.mxu0
    %v359 = vadd.f32 %v262, %v358
    %v360 = vpop.f32.mrf.mxu0
    %361 = vmatprep.mubr.bf16.mxu0 0
    %362 = vmatmul.mubr.bf16.gmra.mxu0 %v86
    %v363 = vpop.f32.mrf.mxu0
    %v364 = vadd.f32 %v267, %v363
    %v365 = vpop.f32.mrf.mxu0
    %v366 = vpop.f32.mrf.mxu0
    %v367 = vadd.f32 %v270, %v366
    %v368 = vpop.f32.mrf.mxu0
    %369 = vdwg.mxu0
    %s370 = scalar_lea.vmem [#allocation2], 128
    %v371 = vld [vmem:[%s370] sm:$0xf]
    %v372 = vld [vmem:[%s370 + $0x4] sm:$0xf]
    %v373 = vld [vmem:[%s370 + $0x8] sm:$0xf]
    %v374 = vld [vmem:[%s370 + $0xc] sm:$0xf]
    %v375 = vld [vmem:[%s370 + $0x10] sm:$0xf]
    %v376 = vld [vmem:[%s370 + $0x14] sm:$0xf]
    %v377 = vld [vmem:[%s370 + $0x18] sm:$0xf]
    %v378 = vld [vmem:[%s370 + $0x1c] sm:$0xf]
    %v379 = vld [vmem:[%s370 + $0x20] sm:$0xf]
    %v380 = vld [vmem:[%s370 + $0x24] sm:$0xf]
    %v381 = vld [vmem:[%s370 + $0x28] sm:$0xf]
    %v382 = vld [vmem:[%s370 + $0x2c] sm:$0xf]
    %v383 = vld [vmem:[%s370 + $0x30] sm:$0xf]
    %v384 = vld [vmem:[%s370 + $0x34] sm:$0xf]
    %v385 = vld [vmem:[%s370 + $0x38] sm:$0xf]
    %v386 = vld [vmem:[%s370 + $0x3c] sm:$0xf]
    %v403 = vunpack.c.l.b16 %v371
    %v404 = vunpack.c.l.b16 %v372
    %v405 = vunpack.c.l.b16 %v373
    %v406 = vunpack.c.l.b16 %v374
    %v407 = vunpack.c.l.b16 %v375
    %v408 = vunpack.c.l.b16 %v376
    %v409 = vunpack.c.l.b16 %v377
    %v410 = vunpack.c.l.b16 %v378
    %v411 = vunpack.c.l.b16 %v379
    %v412 = vunpack.c.l.b16 %v380
    %v413 = vunpack.c.l.b16 %v381
    %v414 = vunpack.c.l.b16 %v382
    %v415 = vunpack.c.l.b16 %v383
    %v416 = vunpack.c.l.b16 %v384
    %v417 = vunpack.c.l.b16 %v385
    %v418 = vunpack.c.l.b16 %v386
    %v419 = vpack.c.b16 %v404, %v403
    %v420 = vpack.c.b16 %v406, %v405
    %v421 = vpack.c.b16 %v408, %v407
    %v422 = vpack.c.b16 %v410, %v409
    %v423 = vpack.c.b16 %v412, %v411
    %v424 = vpack.c.b16 %v414, %v413
    %v425 = vpack.c.b16 %v416, %v415
    %v426 = vpack.c.b16 %v418, %v417
    %435 = vmatprep.subr.bf16.mxu0 0
    %436 = vmatpush1.bf16.msra.mxu0 %v426
    %437 = vmatprep.subr.bf16.mxu0 0
    %438 = vmatpush1.bf16.msra.mxu0 %v425
    %439 = vmatprep.subr.bf16.mxu0 0
    %440 = vmatpush1.bf16.msra.mxu0 %v424
    %441 = vmatprep.subr.bf16.mxu0 0
    %442 = vmatpush1.bf16.msra.mxu0 %v423
    %443 = vmatprep.subr.bf16.mxu0 0
    %444 = vmatpush1.bf16.msra.mxu0 %v422
    %445 = vmatprep.subr.bf16.mxu0 0
    %446 = vmatpush1.bf16.msra.mxu0 %v421
    %447 = vmatprep.subr.bf16.mxu0 0
    %448 = vmatpush1.bf16.msra.mxu0 %v420
    %449 = vmatprep.subr.bf16.mxu0 0
    %450 = vmatpush1.bf16.msra.mxu0 %v419
    %451 = vmatprep.subr.bf16.mxu0 0
    %452 = vmatpush2.bf16.msra.mxu0 0
    %453 = vmatprep.subr.bf16.mxu0 0
    %454 = vmatpush2.bf16.msra.mxu0 0
    %455 = vmatprep.subr.bf16.mxu0 0
    %456 = vmatpush2.bf16.msra.mxu0 0
    %457 = vmatprep.subr.bf16.mxu0 0
    %458 = vmatpush2.bf16.msra.mxu0 0
    %459 = vmatprep.subr.bf16.mxu0 0
    %460 = vmatpush2.bf16.msra.mxu0 0
    %461 = vmatprep.subr.bf16.mxu0 0
    %462 = vmatpush2.bf16.msra.mxu0 0
    %463 = vmatprep.subr.bf16.mxu0 0
    %464 = vmatpush2.bf16.msra.mxu0 0
    %465 = vmatprep.subr.bf16.mxu0 0
    %466 = vmatpush2.bf16.msra.mxu0 0
    %467 = vmatprep.mubr.bf16.mxu0 0
    %468 = vmatmul.mubr.bf16.gmra.mxu0 %v141
    %v469 = vpop.f32.mrf.mxu0
    %v470 = vadd.f32 0.0, %v469
    %v471 = vpop.f32.mrf.mxu0
    %v472 = vpop.f32.mrf.mxu0
    %v473 = vadd.f32 0.0, %v472
    %v474 = vpop.f32.mrf.mxu0
    %475 = vmatprep.mubr.bf16.mxu0 0
    %476 = vmatmul.mubr.bf16.gmra.mxu0 %v142
    %v477 = vpop.f32.mrf.mxu0
    %v478 = vadd.f32 0.0, %v477
    %v479 = vpop.f32.mrf.mxu0
    %v480 = vpop.f32.mrf.mxu0
    %v481 = vadd.f32 0.0, %v480
    %v482 = vpop.f32.mrf.mxu0
    %483 = vdwg.mxu0
    %v484 = vadd.f32 %v356, %v470
    %v485 = vadd.f32 %v359, %v473
    %v486 = vadd.f32 %v364, %v478
    %v487 = vadd.f32 %v367, %v481
    %v488 = vld [vmem:[%s5] sm:$0x1]
    %v489 = vld [vmem:[%s6] sm:$0x1]
    %v490 = vadd.f32 %v484, %v485
    %v491 = vadd.f32 %v490, %v486
    %v492 = vadd.f32 %v491, %v487
    %v493 = vrot.slane %v492, 4
    %v494 = vadd.f32 %v492, %v493
    %v495 = vrot.slane %v494, 2
    %v496 = vadd.f32 %v494, %v495
    %v497 = vrot.slane %v496, 1
    %v498 = vadd.f32 %v496, %v497
    %v499 = vmul.f32 %v484, %v484
    %v500 = vmul.f32 %v485, %v485
    %v501 = vmul.f32 %v486, %v486
    %v502 = vmul.f32 %v487, %v487
    %v503 = vadd.f32 %v499, %v500
    %v504 = vadd.f32 %v503, %v501
    %v505 = vadd.f32 %v504, %v502
    %v506 = vrot.slane %v505, 4
    %v507 = vadd.f32 %v505, %v506
    %v508 = vrot.slane %v507, 2
    %v509 = vadd.f32 %v507, %v508
    %v510 = vrot.slane %v509, 1
    %v511 = vadd.f32 %v509, %v510
    %v512 = vmul.f32 %v498, 0.03125
    %v513 = vmul.f32 %v511, 0.03125
    %v514 = vmul.f32 %v512, %v512
    %v515 = vsub.f32 %v513, %v514
    %v516 = vmax.f32 %v515, 0.0
    %v517 = vadd.f32 %v516, 1e-05
    %v518 = vrsqrt.pop %v517
    %v519 = vmul.f32 %v488, %v518
    %v520 = vmul.f32 %v512, %v519
    %v521 = vsub.f32 %v489, %v520
    %v523 = vlaneseq
    %v524 = vshrl.u32 %v523, 7
    %v525 = vsub.s32 0, %v524
    %v526 = vrot.slane %v519, %v525
    %v528 = vmul.f32 %v484, %v526
    %v529 = vmul.f32 %v485, %v526
    %v530 = vmul.f32 %v486, %v526
    %v531 = vmul.f32 %v487, %v526
    %v533 = vlaneseq
    %v534 = vshrl.u32 %v533, 7
    %v535 = vsub.s32 0, %v534
    %v536 = vrot.slane %v521, %v535
    %v538 = vadd.f32 %v528, %v536
    %v539 = vadd.f32 %v529, %v536
    %v540 = vadd.f32 %v530, %v536
    %v541 = vadd.f32 %v531, %v536
    %v542 = vmax.f32 %v538, 0.0
    %v543 = vmax.f32 %v539, 0.0
    %v544 = vmax.f32 %v540, 0.0
    %v545 = vmax.f32 %v541, 0.0
    %547 = vset.pattern.permute.xlu0 0
    %548 = vperm.xlu0 %547, %v69
    %v549 = vpop.permute.xlu0 %548
    %552 = vset.pattern.permute.xlu0 0
    %553 = vperm.xlu0 %552, %v70
    %v554 = vpop.permute.xlu0 %553
    %557 = vset.pattern.permute.xlu0 0
    %558 = vperm.xlu0 %557, %v71
    %v559 = vpop.permute.xlu0 %558
    %562 = vset.pattern.permute.xlu0 0
    %563 = vperm.xlu0 %562, %v72
    %v564 = vpop.permute.xlu0 %563
    %v566 = vmul.f32 %v542, %v549
    %v567 = vmul.f32 %v543, %v554
    %v568 = vmul.f32 %v544, %v559
    %v569 = vmul.f32 %v545, %v564
    %v570 = vpack.c.bf16 %v567, %v566
    %v571 = vpack.c.bf16 %v569, %v568
    %v573 = vshrl.u32 %v570, 16
    %v575 = vrot.slane %v573, 7
    %v576 = vshll.u32 %v570, 16
    %v578 = vor.u32 %v575, %v576
    %v580 = vshrl.u32 %v571, 16
    %v582 = vrot.slane %v580, 7
    %v583 = vshll.u32 %v571, 16
    %v585 = vor.u32 %v582, %v583
    %v586 = vsel %vm87, %v575, %v585
    %v589 = vsel %vm106, 0, %v578
    %v590 = vmul.bf16 %v589, %v111
    %v591 = vmul.bf16 %v586, %v116
    %v592 = vrot.slane %v576, 1
    %v593 = vor.u32 %v573, %v592
    %v594 = vrot.slane %v583, 1
    %v595 = vsel %vm120, %v593, %v594
    %v596 = vor.u32 %v580, %v594
    %v599 = vsel %vm129, %v596, 0
    %v600 = vmul.bf16 %v595, %v134
    %v601 = vmul.bf16 %v599, %v139
    %s602 = scalar_lea.vmem [#allocation5], 64
    %v603 = vld [vmem:[%s602] sm:$0xf]
    %v604 = vld [vmem:[%s602 + $0x4] sm:$0xf]
    %v605 = vld [vmem:[%s602 + $0x8] sm:$0xf]
    %v606 = vld [vmem:[%s602 + $0xc] sm:$0xf]
    %v607 = vld [vmem:[%s602 + $0x10] sm:$0xf]
    %v608 = vld [vmem:[%s602 + $0x14] sm:$0xf]
    %v609 = vld [vmem:[%s602 + $0x18] sm:$0xf]
    %v610 = vld [vmem:[%s602 + $0x1c] sm:$0xf]
    %v611 = vld [vmem:[%s602 + $0x20] sm:$0xf]
    %v612 = vld [vmem:[%s602 + $0x24] sm:$0xf]
    %v613 = vld [vmem:[%s602 + $0x28] sm:$0xf]
    %v614 = vld [vmem:[%s602 + $0x2c] sm:$0xf]
    %v615 = vld [vmem:[%s602 + $0x30] sm:$0xf]
    %v616 = vld [vmem:[%s602 + $0x34] sm:$0xf]
    %v617 = vld [vmem:[%s602 + $0x38] sm:$0xf]
    %v618 = vld [vmem:[%s602 + $0x3c] sm:$0xf]
    %v619 = vld [vmem:[#allocation5] sm:$0xf]
    %v620 = vld [vmem:[#allocation5 + $0x4] sm:$0xf]
    %v621 = vld [vmem:[#allocation5 + $0x8] sm:$0xf]
    %v622 = vld [vmem:[#allocation5 + $0xc] sm:$0xf]
    %v623 = vld [vmem:[#allocation5 + $0x10] sm:$0xf]
    %v624 = vld [vmem:[#allocation5 + $0x14] sm:$0xf]
    %v625 = vld [vmem:[#allocation5 + $0x18] sm:$0xf]
    %v626 = vld [vmem:[#allocation5 + $0x1c] sm:$0xf]
    %v627 = vld [vmem:[#allocation5 + $0x20] sm:$0xf]
    %v628 = vld [vmem:[#allocation5 + $0x24] sm:$0xf]
    %v629 = vld [vmem:[#allocation5 + $0x28] sm:$0xf]
    %v630 = vld [vmem:[#allocation5 + $0x2c] sm:$0xf]
    %v631 = vld [vmem:[#allocation5 + $0x30] sm:$0xf]
    %v632 = vld [vmem:[#allocation5 + $0x34] sm:$0xf]
    %v633 = vld [vmem:[#allocation5 + $0x38] sm:$0xf]
    %v634 = vld [vmem:[#allocation5 + $0x3c] sm:$0xf]
    %v651 = vunpack.c.l.b16 %v619
    %v652 = vunpack.c.l.b16 %v620
    %v653 = vunpack.c.l.b16 %v621
    %v654 = vunpack.c.l.b16 %v622
    %v655 = vunpack.c.l.b16 %v623
    %v656 = vunpack.c.l.b16 %v624
    %v657 = vunpack.c.l.b16 %v625
    %v658 = vunpack.c.l.b16 %v626
    %v659 = vunpack.c.l.b16 %v627
    %v660 = vunpack.c.l.b16 %v628
    %v661 = vunpack.c.l.b16 %v629
    %v662 = vunpack.c.l.b16 %v630
    %v663 = vunpack.c.l.b16 %v631
    %v664 = vunpack.c.l.b16 %v632
    %v665 = vunpack.c.l.b16 %v633
    %v666 = vunpack.c.l.b16 %v634
    %v667 = vpack.c.b16 %v652, %v651
    %v668 = vpack.c.b16 %v654, %v653
    %v669 = vpack.c.b16 %v656, %v655
    %v670 = vpack.c.b16 %v658, %v657
    %v671 = vpack.c.b16 %v660, %v659
    %v672 = vpack.c.b16 %v662, %v661
    %v673 = vpack.c.b16 %v664, %v663
    %v674 = vpack.c.b16 %v666, %v665
    %683 = vmatprep.subr.bf16.mxu0 0
    %684 = vmatpush1.bf16.msra.mxu0 %v674
    %685 = vmatprep.subr.bf16.mxu0 0
    %686 = vmatpush1.bf16.msra.mxu0 %v673
    %687 = vmatprep.subr.bf16.mxu0 0
    %688 = vmatpush1.bf16.msra.mxu0 %v672
    %689 = vmatprep.subr.bf16.mxu0 0
    %690 = vmatpush1.bf16.msra.mxu0 %v671
    %691 = vmatprep.subr.bf16.mxu0 0
    %692 = vmatpush1.bf16.msra.mxu0 %v670
    %693 = vmatprep.subr.bf16.mxu0 0
    %694 = vmatpush1.bf16.msra.mxu0 %v669
    %695 = vmatprep.subr.bf16.mxu0 0
    %696 = vmatpush1.bf16.msra.mxu0 %v668
    %697 = vmatprep.subr.bf16.mxu0 0
    %698 = vmatpush1.bf16.msra.mxu0 %v667
    %699 = vmatprep.subr.bf16.mxu0 0
    %700 = vmatpush2.bf16.msra.mxu0 0
    %701 = vmatprep.subr.bf16.mxu0 0
    %702 = vmatpush2.bf16.msra.mxu0 0
    %703 = vmatprep.subr.bf16.mxu0 0
    %704 = vmatpush2.bf16.msra.mxu0 0
    %705 = vmatprep.subr.bf16.mxu0 0
    %706 = vmatpush2.bf16.msra.mxu0 0
    %707 = vmatprep.subr.bf16.mxu0 0
    %708 = vmatpush2.bf16.msra.mxu0 0
    %709 = vmatprep.subr.bf16.mxu0 0
    %710 = vmatpush2.bf16.msra.mxu0 0
    %711 = vmatprep.subr.bf16.mxu0 0
    %712 = vmatpush2.bf16.msra.mxu0 0
    %713 = vmatprep.subr.bf16.mxu0 0
    %714 = vmatpush2.bf16.msra.mxu0 0
    %715 = vmatprep.mubr.bf16.mxu0 0
    %716 = vmatmul.mubr.bf16.gmra.mxu0 %v590
    %v717 = vpop.f32.mrf.mxu0
    %v718 = vadd.f32 0.0, %v717
    %v719 = vpop.f32.mrf.mxu0
    %v720 = vpop.f32.mrf.mxu0
    %v721 = vadd.f32 0.0, %v720
    %v722 = vpop.f32.mrf.mxu0
    %723 = vmatprep.mubr.bf16.mxu0 0
    %724 = vmatmul.mubr.bf16.gmra.mxu0 %v591
    %v725 = vpop.f32.mrf.mxu0
    %v726 = vadd.f32 0.0, %v725
    %v727 = vpop.f32.mrf.mxu0
    %v728 = vpop.f32.mrf.mxu0
    %v729 = vadd.f32 0.0, %v728
    %v730 = vpop.f32.mrf.mxu0
    %731 = vdwg.mxu0
    %v748 = vunpack.c.l.b16 %v603
    %v749 = vunpack.c.l.b16 %v604
    %v750 = vunpack.c.l.b16 %v605
    %v751 = vunpack.c.l.b16 %v606
    %v752 = vunpack.c.l.b16 %v607
    %v753 = vunpack.c.l.b16 %v608
    %v754 = vunpack.c.l.b16 %v609
    %v755 = vunpack.c.l.b16 %v610
    %v756 = vunpack.c.l.b16 %v611
    %v757 = vunpack.c.l.b16 %v612
    %v758 = vunpack.c.l.b16 %v613
    %v759 = vunpack.c.l.b16 %v614
    %v760 = vunpack.c.l.b16 %v615
    %v761 = vunpack.c.l.b16 %v616
    %v762 = vunpack.c.l.b16 %v617
    %v763 = vunpack.c.l.b16 %v618
    %v764 = vpack.c.b16 %v749, %v748
    %v765 = vpack.c.b16 %v751, %v750
    %v766 = vpack.c.b16 %v753, %v752
    %v767 = vpack.c.b16 %v755, %v754
    %v768 = vpack.c.b16 %v757, %v756
    %v769 = vpack.c.b16 %v759, %v758
    %v770 = vpack.c.b16 %v761, %v760
    %v771 = vpack.c.b16 %v763, %v762
    %780 = vmatprep.subr.bf16.mxu0 0
    %781 = vmatpush1.bf16.msra.mxu0 %v771
    %782 = vmatprep.subr.bf16.mxu0 0
    %783 = vmatpush1.bf16.msra.mxu0 %v770
    %784 = vmatprep.subr.bf16.mxu0 0
    %785 = vmatpush1.bf16.msra.mxu0 %v769
    %786 = vmatprep.subr.bf16.mxu0 0
    %787 = vmatpush1.bf16.msra.mxu0 %v768
    %788 = vmatprep.subr.bf16.mxu0 0
    %789 = vmatpush1.bf16.msra.mxu0 %v767
    %790 = vmatprep.subr.bf16.mxu0 0
    %791 = vmatpush1.bf16.msra.mxu0 %v766
    %792 = vmatprep.subr.bf16.mxu0 0
    %793 = vmatpush1.bf16.msra.mxu0 %v765
    %794 = vmatprep.subr.bf16.mxu0 0
    %795 = vmatpush1.bf16.msra.mxu0 %v764
    %796 = vmatprep.subr.bf16.mxu0 0
    %797 = vmatpush2.bf16.msra.mxu0 0
    %798 = vmatprep.subr.bf16.mxu0 0
    %799 = vmatpush2.bf16.msra.mxu0 0
    %800 = vmatprep.subr.bf16.mxu0 0
    %801 = vmatpush2.bf16.msra.mxu0 0
    %802 = vmatprep.subr.bf16.mxu0 0
    %803 = vmatpush2.bf16.msra.mxu0 0
    %804 = vmatprep.subr.bf16.mxu0 0
    %805 = vmatpush2.bf16.msra.mxu0 0
    %806 = vmatprep.subr.bf16.mxu0 0
    %807 = vmatpush2.bf16.msra.mxu0 0
    %808 = vmatprep.subr.bf16.mxu0 0
    %809 = vmatpush2.bf16.msra.mxu0 0
    %810 = vmatprep.subr.bf16.mxu0 0
    %811 = vmatpush2.bf16.msra.mxu0 0
    %812 = vmatprep.mubr.bf16.mxu0 0
    %813 = vmatmul.mubr.bf16.gmra.mxu0 %v570
    %v814 = vpop.f32.mrf.mxu0
    %v815 = vadd.f32 %v718, %v814
    %v816 = vpop.f32.mrf.mxu0
    %v817 = vpop.f32.mrf.mxu0
    %v818 = vadd.f32 %v721, %v817
    %v819 = vpop.f32.mrf.mxu0
    %820 = vmatprep.mubr.bf16.mxu0 0
    %821 = vmatmul.mubr.bf16.gmra.mxu0 %v571
    %v822 = vpop.f32.mrf.mxu0
    %v823 = vadd.f32 %v726, %v822
    %v824 = vpop.f32.mrf.mxu0
    %v825 = vpop.f32.mrf.mxu0
    %v826 = vadd.f32 %v729, %v825
    %v827 = vpop.f32.mrf.mxu0
    %828 = vdwg.mxu0
    %s829 = scalar_lea.vmem [#allocation5], 128
    %v830 = vld [vmem:[%s829] sm:$0xf]
    %v831 = vld [vmem:[%s829 + $0x4] sm:$0xf]
    %v832 = vld [vmem:[%s829 + $0x8] sm:$0xf]
    %v833 = vld [vmem:[%s829 + $0xc] sm:$0xf]
    %v834 = vld [vmem:[%s829 + $0x10] sm:$0xf]
    %v835 = vld [vmem:[%s829 + $0x14] sm:$0xf]
    %v836 = vld [vmem:[%s829 + $0x18] sm:$0xf]
    %v837 = vld [vmem:[%s829 + $0x1c] sm:$0xf]
    %v838 = vld [vmem:[%s829 + $0x20] sm:$0xf]
    %v839 = vld [vmem:[%s829 + $0x24] sm:$0xf]
    %v840 = vld [vmem:[%s829 + $0x28] sm:$0xf]
    %v841 = vld [vmem:[%s829 + $0x2c] sm:$0xf]
    %v842 = vld [vmem:[%s829 + $0x30] sm:$0xf]
    %v843 = vld [vmem:[%s829 + $0x34] sm:$0xf]
    %v844 = vld [vmem:[%s829 + $0x38] sm:$0xf]
    %v845 = vld [vmem:[%s829 + $0x3c] sm:$0xf]
    %v862 = vunpack.c.l.b16 %v830
    %v863 = vunpack.c.l.b16 %v831
    %v864 = vunpack.c.l.b16 %v832
    %v865 = vunpack.c.l.b16 %v833
    %v866 = vunpack.c.l.b16 %v834
    %v867 = vunpack.c.l.b16 %v835
    %v868 = vunpack.c.l.b16 %v836
    %v869 = vunpack.c.l.b16 %v837
    %v870 = vunpack.c.l.b16 %v838
    %v871 = vunpack.c.l.b16 %v839
    %v872 = vunpack.c.l.b16 %v840
    %v873 = vunpack.c.l.b16 %v841
    %v874 = vunpack.c.l.b16 %v842
    %v875 = vunpack.c.l.b16 %v843
    %v876 = vunpack.c.l.b16 %v844
    %v877 = vunpack.c.l.b16 %v845
    %v878 = vpack.c.b16 %v863, %v862
    %v879 = vpack.c.b16 %v865, %v864
    %v880 = vpack.c.b16 %v867, %v866
    %v881 = vpack.c.b16 %v869, %v868
    %v882 = vpack.c.b16 %v871, %v870
    %v883 = vpack.c.b16 %v873, %v872
    %v884 = vpack.c.b16 %v875, %v874
    %v885 = vpack.c.b16 %v877, %v876
    %894 = vmatprep.subr.bf16.mxu0 0
    %895 = vmatpush1.bf16.msra.mxu0 %v885
    %896 = vmatprep.subr.bf16.mxu0 0
    %897 = vmatpush1.bf16.msra.mxu0 %v884
    %898 = vmatprep.subr.bf16.mxu0 0
    %899 = vmatpush1.bf16.msra.mxu0 %v883
    %900 = vmatprep.subr.bf16.mxu0 0
    %901 = vmatpush1.bf16.msra.mxu0 %v882
    %902 = vmatprep.subr.bf16.mxu0 0
    %903 = vmatpush1.bf16.msra.mxu0 %v881
    %904 = vmatprep.subr.bf16.mxu0 0
    %905 = vmatpush1.bf16.msra.mxu0 %v880
    %906 = vmatprep.subr.bf16.mxu0 0
    %907 = vmatpush1.bf16.msra.mxu0 %v879
    %908 = vmatprep.subr.bf16.mxu0 0
    %909 = vmatpush1.bf16.msra.mxu0 %v878
    %910 = vmatprep.subr.bf16.mxu0 0
    %911 = vmatpush2.bf16.msra.mxu0 0
    %912 = vmatprep.subr.bf16.mxu0 0
    %913 = vmatpush2.bf16.msra.mxu0 0
    %914 = vmatprep.subr.bf16.mxu0 0
    %915 = vmatpush2.bf16.msra.mxu0 0
    %916 = vmatprep.subr.bf16.mxu0 0
    %917 = vmatpush2.bf16.msra.mxu0 0
    %918 = vmatprep.subr.bf16.mxu0 0
    %919 = vmatpush2.bf16.msra.mxu0 0
    %920 = vmatprep.subr.bf16.mxu0 0
    %921 = vmatpush2.bf16.msra.mxu0 0
    %922 = vmatprep.subr.bf16.mxu0 0
    %923 = vmatpush2.bf16.msra.mxu0 0
    %924 = vmatprep.subr.bf16.mxu0 0
    %925 = vmatpush2.bf16.msra.mxu0 0
    %926 = vmatprep.mubr.bf16.mxu0 0
    %927 = vmatmul.mubr.bf16.gmra.mxu0 %v600
    %v928 = vpop.f32.mrf.mxu0
    %v929 = vadd.f32 0.0, %v928
    %v930 = vpop.f32.mrf.mxu0
    %v931 = vpop.f32.mrf.mxu0
    %v932 = vadd.f32 0.0, %v931
    %v933 = vpop.f32.mrf.mxu0
    %934 = vmatprep.mubr.bf16.mxu0 0
    %935 = vmatmul.mubr.bf16.gmra.mxu0 %v601
    %v936 = vpop.f32.mrf.mxu0
    %v937 = vadd.f32 0.0, %v936
    %v938 = vpop.f32.mrf.mxu0
    %v939 = vpop.f32.mrf.mxu0
    %v940 = vadd.f32 0.0, %v939
    %v941 = vpop.f32.mrf.mxu0
    %942 = vdwg.mxu0
    %v943 = vadd.f32 %v815, %v929
    %v944 = vadd.f32 %v818, %v932
    %v945 = vadd.f32 %v823, %v937
    %v946 = vadd.f32 %v826, %v940
    %v947 = vld [vmem:[%s8] sm:$0x1]
    %v948 = vld [vmem:[%s9] sm:$0x1]
    %v949 = vadd.f32 %v943, %v944
    %v950 = vadd.f32 %v949, %v945
    %v951 = vadd.f32 %v950, %v946
    %v952 = vrot.slane %v951, 4
    %v953 = vadd.f32 %v951, %v952
    %v954 = vrot.slane %v953, 2
    %v955 = vadd.f32 %v953, %v954
    %v956 = vrot.slane %v955, 1
    %v957 = vadd.f32 %v955, %v956
    %v958 = vmul.f32 %v943, %v943
    %v959 = vmul.f32 %v944, %v944
    %v960 = vmul.f32 %v945, %v945
    %v961 = vmul.f32 %v946, %v946
    %v962 = vadd.f32 %v958, %v959
    %v963 = vadd.f32 %v962, %v960
    %v964 = vadd.f32 %v963, %v961
    %v965 = vrot.slane %v964, 4
    %v966 = vadd.f32 %v964, %v965
    %v967 = vrot.slane %v966, 2
    %v968 = vadd.f32 %v966, %v967
    %v969 = vrot.slane %v968, 1
    %v970 = vadd.f32 %v968, %v969
    %v971 = vmul.f32 %v957, 0.03125
    %v972 = vmul.f32 %v970, 0.03125
    %v973 = vmul.f32 %v971, %v971
    %v974 = vsub.f32 %v972, %v973
    %v975 = vmax.f32 %v974, 0.0
    %v976 = vadd.f32 %v975, 1e-05
    %v977 = vrsqrt.pop %v976
    %v978 = vmul.f32 %v947, %v977
    %v979 = vmul.f32 %v971, %v978
    %v980 = vsub.f32 %v948, %v979
    %v982 = vlaneseq
    %v983 = vshrl.u32 %v982, 7
    %v984 = vsub.s32 0, %v983
    %v985 = vrot.slane %v978, %v984
    %v987 = vmul.f32 %v943, %v985
    %v988 = vmul.f32 %v944, %v985
    %v989 = vmul.f32 %v945, %v985
    %v990 = vmul.f32 %v946, %v985
    %v992 = vlaneseq
    %v993 = vshrl.u32 %v992, 7
    %v994 = vsub.s32 0, %v993
    %v995 = vrot.slane %v980, %v994
    %v997 = vadd.f32 %v987, %v995
    %v998 = vadd.f32 %v988, %v995
    %v999 = vadd.f32 %v989, %v995
    %v1000 = vadd.f32 %v990, %v995
    %v1001 = vmax.f32 %v997, 0.0
    %v1002 = vmax.f32 %v998, 0.0
    %v1003 = vmax.f32 %v999, 0.0
    %v1004 = vmax.f32 %v1000, 0.0
    %v1005 = vadd.f32 %v1001, %v65
    %v1006 = vadd.f32 %v1002, %v66
    %v1007 = vadd.f32 %v1003, %v67
    %v1008 = vadd.f32 %v1004, %v68
    %1009 = vst [vmem:[#allocation7] sm:$0xff] %v1005
    %1010 = vst [vmem:[#allocation7 + $0x8] sm:$0xff] %v1006
    %1011 = vst [vmem:[#allocation7 + $0x10] sm:$0xff] %v1007
    %1012 = vst [vmem:[#allocation7 + $0x18] sm:$0xff] %v1008
    // Predicated region
    $region50: #{tpu_custom_call.1} parent=1 // pred_check
      _
    $region51: #{tpu_custom_call.1} parent=1 // pred_check_branch
      %1014 = sbr.rel (0) target = $region53
    $region52: #{tpu_custom_call.1} parent=1 // pred_region
      %s1016 = ssub.s32 512, 512
      %1017 = vsyncadd [#allocation4], %s1016
      %s1018 = sshll.u32 [#allocation7], 4
      %s1019 = int_to_ptr.vmem [resolvable:$true] %s1018
      %1024 = dma.vmem_to_hbm [thread:$0]  %s1019, 512, %s10, [#allocation4], 128, 128, 8
    $region53: #{tpu_custom_call.1} parent=1 // pred_fallthru
      _
    // Predicated region
    $region54: #{tpu_custom_call.1} parent=1 // pred_check
      _
    $region55: #{tpu_custom_call.1} parent=1 // pred_check_branch
      %1026 = sbr.rel (0) target = $region57
    $region56: #{tpu_custom_call.1} parent=1 // pred_region
      %1027 = dma.done [#allocation4], 512
    $region57: #{tpu_custom_call.1} parent=1 // pred_fallthru
      _
    %1028 = vsyncpa [#allocation3], 1
    %1029 = vsyncpa [#allocation6], 1
    %1030 = vsyncpa [#allocation4], 1

</llo_original>
